<compile_context>
chip_gen: v6e
topology: v6e:2x2x1
jax: 0.10.0
libtpu: 0.0.40
codegen_flags: <defaults>
</compile_context>

<pallas_src>
import jax
import jax.numpy as jnp
from jax.experimental import pallas as pl
from jax.experimental.pallas import tpu as pltpu


def lstm_linear_kernel(x_ref, wih_t_ref, whh_t_ref, b_ref,
                       wlin_t_ref, blin_ref, out_ref, gx_ref):
    T = x_ref.shape[0]
    GW = whh_t_ref.shape[1]        # packed gate width == 4 * HP (multiple of 128)
    HP = GW // 4                   # per-gate lane block (padded hidden width)

    # --- Hoisted reads / constants (outside the serial recurrence) ----------
    whh = whh_t_ref[...]           # (GW, GW) bf16, rows >= H are zero

    # Per-lane activation constants.  Gate order along lanes: [i | f | g | o].
    # Sigmoid gates (i, f, o) already carry a 0.5 pre-scale folded into the
    # weights/bias, so one tanh + one fused multiply-add yields all gates:
    #   sigmoid(z) = 0.5 * tanh(0.5 * z) + 0.5 ; tanh gate (g) passes through.
    lane = jax.lax.broadcasted_iota(jnp.int32, (1, GW), 1)
    is_g = (lane >= 2 * HP) & (lane < 3 * HP)
    post_scale = jnp.where(is_g, 1.0, 0.5).astype(jnp.float32)
    post_bias = jnp.where(is_g, 0.0, 0.5).astype(jnp.float32)

    # --- Hoisted input projection (+ combined, pre-scaled bias) -------------
    # One MXU matmul covers all T timesteps; staged in VMEM scratch so the
    # per-step row read issues in the vld slot.
    gx_ref[...] = (jnp.dot(x_ref[...], wih_t_ref[...],
                           preferred_element_type=jnp.float32) + b_ref[...])

    def cell(gates, c):
        # gates: (1, GW) pre-scaled pre-activations, blocks [i | f | g | o].
        a = jnp.tanh(gates) * post_scale + post_bias        # one EUP push
        # Rotate f / g / o blocks onto h/c's lanes [0, HP)   (XLU slot).
        f_al = pltpu.roll(a, shift=GW - 1 * HP, axis=1)
        g_al = pltpu.roll(a, shift=GW - 2 * HP, axis=1)
        o_al = pltpu.roll(a, shift=GW - 3 * HP, axis=1)
        c_new = f_al * c + a * g_al                          # i already at lanes [0, HP)
        h_new = o_al * jnp.tanh(c_new)
        # Lanes >= HP of (h_new, c_new) hold bounded junk from the rotations;
        # zero rows of W_hh^T / W_lin^T make it inert.
        return h_new, c_new

    # --- Fully unrolled recurrence (T static & small) ------------------------
    # t = 0: h == 0, so the recurrent matmul is skipped entirely.
    h, c = cell(gx_ref[0:1, :], jnp.zeros((1, GW), jnp.float32))

    for t in range(1, T):
        g_rec = jnp.dot(h.astype(jnp.bfloat16), whh,
                        preferred_element_type=jnp.float32)  # (1, GW)
        h, c = cell(gx_ref[t:t + 1, :] + g_rec, c)

    # --- Final Linear on the last hidden state (== predictions[-1]) ---------
    out_ref[...] = (jnp.dot(h.astype(jnp.bfloat16), wlin_t_ref[...],
                            preferred_element_type=jnp.float32)
                    + blin_ref[...]).astype(out_ref.dtype)


def lstm_forward(input_seq, params):
    """input_seq: (T, D_in) float32. Returns (O,) == predictions[-1]."""
    w_ih, w_hh, b_ih, b_hh, w_lin, b_lin = (
        params["w_ih"], params["w_hh"], params["b_ih"],
        params["b_hh"], params["w_lin"], params["b_lin"])

    T, D_in = input_seq.shape
    H = w_hh.shape[1]
    O = w_lin.shape[0]
    HP = ((H + 31) // 32) * 32      # per-gate block; 4*HP is a multiple of 128 lanes
    GW = 4 * HP

    # 0.5 pre-scale of the sigmoid gates (i, f, o) folded into the packed
    # weights/bias so the kernel needs only one tanh + one FMA per step.
    gate_scale = jnp.array([0.5, 0.5, 1.0, 0.5], jnp.float32)   # [i, f, g, o]

    def pack_gates(w_t):
        # (rows, 4H) [i,f,g,o] -> (rows, GW): each gate in its own HP-lane
        # block (zero-padded past H), sigmoid gates pre-scaled by 0.5.
        rows = w_t.shape[0]
        w4 = w_t.reshape(rows, 4, H) * gate_scale[None, :, None]
        w4 = jnp.pad(w4, ((0, 0), (0, 0), (0, HP - H)))
        return w4.reshape(rows, GW)

    # glue: pre-transpose / pack / cast weights (plain JAX, outside the kernel)
    x_bf = input_seq.astype(jnp.bfloat16)                                  # (T, D_in)
    wih_t = pack_gates(w_ih.T).astype(jnp.bfloat16)                        # (D_in, GW)
    whh_t = jnp.pad(pack_gates(w_hh.T),
                    ((0, GW - H), (0, 0))).astype(jnp.bfloat16)            # (GW, GW)
    b = pack_gates((b_ih + b_hh)[None, :]).astype(jnp.float32)             # (1, GW)
    wlin_t = jnp.pad(w_lin.T, ((0, GW - H), (0, 0))).astype(jnp.bfloat16)  # (GW, O)
    blin = b_lin[None, :].astype(jnp.float32)                              # (1, O)

    vmem = lambda: pl.BlockSpec(memory_space=pltpu.MemorySpace.VMEM)

    out = pl.pallas_call(
        lstm_linear_kernel,
        out_shape=jax.ShapeDtypeStruct((1, O), jnp.float32),
        in_specs=[vmem() for _ in range(6)],
        out_specs=vmem(),
        scratch_shapes=[pltpu.VMEM((T, GW), jnp.float32)],
    )(x_bf, wih_t, whh_t, b, wlin_t, blin)
    return out[0]


def _reference(input_seq, params):
    """Pure-JAX f32 reference matching torch.nn.LSTM + nn.Linear semantics."""
    w_ih, w_hh, b_ih, b_hh, w_lin, b_lin = (
        params["w_ih"], params["w_hh"], params["b_ih"],
        params["b_hh"], params["w_lin"], params["b_lin"])
    H = w_hh.shape[1]

    def step(carry, xt):
        h, c = carry
        gates = xt @ w_ih.T + b_ih + h @ w_hh.T + b_hh
        i = jax.nn.sigmoid(gates[0 * H:1 * H])
        f = jax.nn.sigmoid(gates[1 * H:2 * H])
        g = jnp.tanh(gates[2 * H:3 * H])
        o = jax.nn.sigmoid(gates[3 * H:4 * H])
        c_new = f * c + i * g
        h_new = o * jnp.tanh(c_new)
        return (h_new, c_new), h_new

    h0 = jnp.zeros((H,), jnp.float32)
    (h_last, _), _ = jax.lax.scan(step, (h0, h0), input_seq)
    return h_last @ w_lin.T + b_lin


if __name__ == "__main__":
    # Small shapes consistent with the module's forward:
    #   input_seq -> view(T, 1, input_size);  T=8, input_size=8, hidden=32, out=4
    T, D_IN, H, O = 8, 8, 32, 4

    key = jax.random.PRNGKey(0)
    k = jax.random.split(key, 7)
    scale = 1.0 / jnp.sqrt(H)
    params = {
        "w_ih":  jax.random.uniform(k[0], (4 * H, D_IN), jnp.float32, -scale, scale),
        "w_hh":  jax.random.uniform(k[1], (4 * H, H),    jnp.float32, -scale, scale),
        "b_ih":  jax.random.uniform(k[2], (4 * H,),      jnp.float32, -scale, scale),
        "b_hh":  jax.random.uniform(k[3], (4 * H,),      jnp.float32, -scale, scale),
        "w_lin": jax.random.uniform(k[4], (O, H),        jnp.float32, -scale, scale),
        "b_lin": jax.random.uniform(k[5], (O,),          jnp.float32, -scale, scale),
    }
    input_seq = jax.random.normal(k[6], (T, D_IN), jnp.float32)

    out = jax.block_until_ready(lstm_forward(input_seq, params))
    ref = jax.block_until_ready(_reference(input_seq, params))

    assert out.shape == (O,)
    # Tolerance relaxed vs the f32 reference because the kernel uses bf16 MXU
    # operands (f32 accumulation and f32 gate/state math).
    assert jnp.allclose(out, ref, atol=2e-2, rtol=2e-2), (out, ref)
    print("KERNEL_OK")
</pallas_src>

<mosaic_0001>
module attributes {stable_mosaic.version = 11 : i64} {
  func.func @lstm_linear_kernel(%arg0: memref<8x8xbf16, #tpu.memory_space<vmem>>, %arg1: memref<8x128xbf16, #tpu.memory_space<vmem>>, %arg2: memref<128x128xbf16, #tpu.memory_space<vmem>>, %arg3: memref<1x128xf32, #tpu.memory_space<vmem>>, %arg4: memref<128x4xbf16, #tpu.memory_space<vmem>>, %arg5: memref<1x4xf32, #tpu.memory_space<vmem>>, %arg6: memref<1x4xf32, #tpu.memory_space<vmem>>, %arg7: memref<8x128xf32, #tpu.memory_space<vmem>>) attributes {dimension_semantics = [], scalar_prefetch = 0 : i64, scratch_operands = 1 : i64, tpu.core_type = #tpu.core_type<tc>} {
    %c0 = arith.constant 0 : index
    %c0_0 = arith.constant 0 : index
    %0 = vector.load %arg2[%c0, %c0_0] : memref<128x128xbf16, #tpu.memory_space<vmem>>, vector<128x128xbf16>
    %1 = tpu.iota {dimensions = array<i32: 1>} : vector<1x128xi32>
    %c64_i32 = arith.constant 64 : i32
    %2 = vector.broadcast %c64_i32 : i32 to vector<1x128xi32>
    %3 = arith.cmpi sge, %1, %2 : vector<1x128xi32>
    %c96_i32 = arith.constant 96 : i32
    %4 = vector.broadcast %c96_i32 : i32 to vector<1x128xi32>
    %5 = arith.cmpi slt, %1, %4 : vector<1x128xi32>
    %6 = arith.andi %3, %5 : vector<1x128xi1>
    %cst = arith.constant 1.000000e+00 : f32
    %cst_1 = arith.constant 5.000000e-01 : f32
    %7 = vector.broadcast %cst : f32 to vector<1x128xf32>
    %8 = vector.broadcast %cst_1 : f32 to vector<1x128xf32>
    %9 = arith.select %6, %7, %8 : vector<1x128xi1>, vector<1x128xf32>
    %cst_2 = arith.constant 0.000000e+00 : f32
    %cst_3 = arith.constant 5.000000e-01 : f32
    %10 = vector.broadcast %cst_2 : f32 to vector<1x128xf32>
    %11 = vector.broadcast %cst_3 : f32 to vector<1x128xf32>
    %12 = arith.select %6, %10, %11 : vector<1x128xi1>, vector<1x128xf32>
    %c0_4 = arith.constant 0 : index
    %c0_5 = arith.constant 0 : index
    %13 = vector.load %arg0[%c0_4, %c0_5] : memref<8x8xbf16, #tpu.memory_space<vmem>>, vector<8x8xbf16>
    %c0_6 = arith.constant 0 : index
    %c0_7 = arith.constant 0 : index
    %14 = vector.load %arg1[%c0_6, %c0_7] : memref<8x128xbf16, #tpu.memory_space<vmem>>, vector<8x128xbf16>
    %cst_8 = arith.constant dense<0.000000e+00> : vector<8x128xf32>
    %15 = tpu.matmul %13, %14, %cst_8 {dimension_numbers = #tpu.dot_dimension_numbers<[1], [0], [0], [1], [0, 0, 1, 1], [], []>} : vector<8x8xbf16>, vector<8x128xbf16>, vector<8x128xf32> -> vector<8x128xf32>
    %c0_9 = arith.constant 0 : index
    %c0_10 = arith.constant 0 : index
    %16 = vector.load %arg3[%c0_9, %c0_10] : memref<1x128xf32, #tpu.memory_space<vmem>>, vector<1x128xf32>
    %17 = vector.broadcast %16 : vector<1x128xf32> to vector<8x128xf32>
    %18 = arith.addf %15, %17 : vector<8x128xf32>
    %c0_11 = arith.constant 0 : index
    %c0_12 = arith.constant 0 : index
    %19 = vector.load %arg7[%c0_11, %c0_12] : memref<8x128xf32, #tpu.memory_space<vmem>>, vector<8x128xf32>
    tpu.vector_store %arg7[%c0_11, %c0_12], %18 {strides = array<i32>} : memref<8x128xf32, #tpu.memory_space<vmem>>, vector<8x128xf32>,
    %c0_13 = arith.constant 0 : index
    %c0_14 = arith.constant 0 : index
    %20 = vector.load %arg7[%c0_13, %c0_14] : memref<8x128xf32, #tpu.memory_space<vmem>>, vector<1x128xf32>
    %cst_15 = arith.constant 0.000000e+00 : f32
    %21 = vector.broadcast %cst_15 : f32 to vector<1x128xf32>
    %22 = math.tanh %20 : vector<1x128xf32>
    %23 = arith.mulf %22, %9 : vector<1x128xf32>
    %24 = arith.addf %23, %12 : vector<1x128xf32>
    %c96_i32_16 = arith.constant 96 : i32
    %25 = tpu.dynamic_rotate %24 by %c96_i32_16 dim 1 : vector<1x128xf32>, i32 -> vector<1x128xf32>
    %c64_i32_17 = arith.constant 64 : i32
    %26 = tpu.dynamic_rotate %24 by %c64_i32_17 dim 1 : vector<1x128xf32>, i32 -> vector<1x128xf32>
    %c32_i32 = arith.constant 32 : i32
    %27 = tpu.dynamic_rotate %24 by %c32_i32 dim 1 : vector<1x128xf32>, i32 -> vector<1x128xf32>
    %28 = arith.mulf %25, %21 : vector<1x128xf32>
    %29 = arith.mulf %24, %26 : vector<1x128xf32>
    %30 = arith.addf %28, %29 : vector<1x128xf32>
    %31 = math.tanh %30 : vector<1x128xf32>
    %32 = arith.mulf %27, %31 : vector<1x128xf32>
    %33 = arith.truncf %32 : vector<1x128xf32> to vector<1x128xbf16>
    %cst_18 = arith.constant dense<0.000000e+00> : vector<1x128xf32>
    %34 = tpu.matmul %33, %0, %cst_18 {dimension_numbers = #tpu.dot_dimension_numbers<[1], [0], [0], [1], [0, 0, 1, 1], [], []>} : vector<1x128xbf16>, vector<128x128xbf16>, vector<1x128xf32> -> vector<1x128xf32>
    %c1 = arith.constant 1 : index
    %c0_19 = arith.constant 0 : index
    %35 = vector.load %arg7[%c1, %c0_19] : memref<8x128xf32, #tpu.memory_space<vmem>>, vector<1x128xf32>
    %36 = arith.addf %35, %34 : vector<1x128xf32>
    %37 = math.tanh %36 : vector<1x128xf32>
    %38 = arith.mulf %37, %9 : vector<1x128xf32>
    %39 = arith.addf %38, %12 : vector<1x128xf32>
    %c96_i32_20 = arith.constant 96 : i32
    %40 = tpu.dynamic_rotate %39 by %c96_i32_20 dim 1 : vector<1x128xf32>, i32 -> vector<1x128xf32>
    %c64_i32_21 = arith.constant 64 : i32
    %41 = tpu.dynamic_rotate %39 by %c64_i32_21 dim 1 : vector<1x128xf32>, i32 -> vector<1x128xf32>
    %c32_i32_22 = arith.constant 32 : i32
    %42 = tpu.dynamic_rotate %39 by %c32_i32_22 dim 1 : vector<1x128xf32>, i32 -> vector<1x128xf32>
    %43 = arith.mulf %40, %30 : vector<1x128xf32>
    %44 = arith.mulf %39, %41 : vector<1x128xf32>
    %45 = arith.addf %43, %44 : vector<1x128xf32>
    %46 = math.tanh %45 : vector<1x128xf32>
    %47 = arith.mulf %42, %46 : vector<1x128xf32>
    %48 = arith.truncf %47 : vector<1x128xf32> to vector<1x128xbf16>
    %cst_23 = arith.constant dense<0.000000e+00> : vector<1x128xf32>
    %49 = tpu.matmul %48, %0, %cst_23 {dimension_numbers = #tpu.dot_dimension_numbers<[1], [0], [0], [1], [0, 0, 1, 1], [], []>} : vector<1x128xbf16>, vector<128x128xbf16>, vector<1x128xf32> -> vector<1x128xf32>
    %c2 = arith.constant 2 : index
    %c0_24 = arith.constant 0 : index
    %50 = vector.load %arg7[%c2, %c0_24] : memref<8x128xf32, #tpu.memory_space<vmem>>, vector<1x128xf32>
    %51 = arith.addf %50, %49 : vector<1x128xf32>
    %52 = math.tanh %51 : vector<1x128xf32>
    %53 = arith.mulf %52, %9 : vector<1x128xf32>
    %54 = arith.addf %53, %12 : vector<1x128xf32>
    %c96_i32_25 = arith.constant 96 : i32
    %55 = tpu.dynamic_rotate %54 by %c96_i32_25 dim 1 : vector<1x128xf32>, i32 -> vector<1x128xf32>
    %c64_i32_26 = arith.constant 64 : i32
    %56 = tpu.dynamic_rotate %54 by %c64_i32_26 dim 1 : vector<1x128xf32>, i32 -> vector<1x128xf32>
    %c32_i32_27 = arith.constant 32 : i32
    %57 = tpu.dynamic_rotate %54 by %c32_i32_27 dim 1 : vector<1x128xf32>, i32 -> vector<1x128xf32>
    %58 = arith.mulf %55, %45 : vector<1x128xf32>
    %59 = arith.mulf %54, %56 : vector<1x128xf32>
    %60 = arith.addf %58, %59 : vector<1x128xf32>
    %61 = math.tanh %60 : vector<1x128xf32>
    %62 = arith.mulf %57, %61 : vector<1x128xf32>
    %63 = arith.truncf %62 : vector<1x128xf32> to vector<1x128xbf16>
    %cst_28 = arith.constant dense<0.000000e+00> : vector<1x128xf32>
    %64 = tpu.matmul %63, %0, %cst_28 {dimension_numbers = #tpu.dot_dimension_numbers<[1], [0], [0], [1], [0, 0, 1, 1], [], []>} : vector<1x128xbf16>, vector<128x128xbf16>, vector<1x128xf32> -> vector<1x128xf32>
    %c3 = arith.constant 3 : index
    %c0_29 = arith.constant 0 : index
    %65 = vector.load %arg7[%c3, %c0_29] : memref<8x128xf32, #tpu.memory_space<vmem>>, vector<1x128xf32>
    %66 = arith.addf %65, %64 : vector<1x128xf32>
    %67 = math.tanh %66 : vector<1x128xf32>
    %68 = arith.mulf %67, %9 : vector<1x128xf32>
    %69 = arith.addf %68, %12 : vector<1x128xf32>
    %c96_i32_30 = arith.constant 96 : i32
    %70 = tpu.dynamic_rotate %69 by %c96_i32_30 dim 1 : vector<1x128xf32>, i32 -> vector<1x128xf32>
    %c64_i32_31 = arith.constant 64 : i32
    %71 = tpu.dynamic_rotate %69 by %c64_i32_31 dim 1 : vector<1x128xf32>, i32 -> vector<1x128xf32>
    %c32_i32_32 = arith.constant 32 : i32
    %72 = tpu.dynamic_rotate %69 by %c32_i32_32 dim 1 : vector<1x128xf32>, i32 -> vector<1x128xf32>
    %73 = arith.mulf %70, %60 : vector<1x128xf32>
    %74 = arith.mulf %69, %71 : vector<1x128xf32>
    %75 = arith.addf %73, %74 : vector<1x128xf32>
    %76 = math.tanh %75 : vector<1x128xf32>
    %77 = arith.mulf %72, %76 : vector<1x128xf32>
    %78 = arith.truncf %77 : vector<1x128xf32> to vector<1x128xbf16>
    %cst_33 = arith.constant dense<0.000000e+00> : vector<1x128xf32>
    %79 = tpu.matmul %78, %0, %cst_33 {dimension_numbers = #tpu.dot_dimension_numbers<[1], [0], [0], [1], [0, 0, 1, 1], [], []>} : vector<1x128xbf16>, vector<128x128xbf16>, vector<1x128xf32> -> vector<1x128xf32>
    %c4 = arith.constant 4 : index
    %c0_34 = arith.constant 0 : index
    %80 = vector.load %arg7[%c4, %c0_34] : memref<8x128xf32, #tpu.memory_space<vmem>>, vector<1x128xf32>
    %81 = arith.addf %80, %79 : vector<1x128xf32>
    %82 = math.tanh %81 : vector<1x128xf32>
    %83 = arith.mulf %82, %9 : vector<1x128xf32>
    %84 = arith.addf %83, %12 : vector<1x128xf32>
    %c96_i32_35 = arith.constant 96 : i32
    %85 = tpu.dynamic_rotate %84 by %c96_i32_35 dim 1 : vector<1x128xf32>, i32 -> vector<1x128xf32>
    %c64_i32_36 = arith.constant 64 : i32
    %86 = tpu.dynamic_rotate %84 by %c64_i32_36 dim 1 : vector<1x128xf32>, i32 -> vector<1x128xf32>
    %c32_i32_37 = arith.constant 32 : i32
    %87 = tpu.dynamic_rotate %84 by %c32_i32_37 dim 1 : vector<1x128xf32>, i32 -> vector<1x128xf32>
    %88 = arith.mulf %85, %75 : vector<1x128xf32>
    %89 = arith.mulf %84, %86 : vector<1x128xf32>
    %90 = arith.addf %88, %89 : vector<1x128xf32>
    %91 = math.tanh %90 : vector<1x128xf32>
    %92 = arith.mulf %87, %91 : vector<1x128xf32>
    %93 = arith.truncf %92 : vector<1x128xf32> to vector<1x128xbf16>
    %cst_38 = arith.constant dense<0.000000e+00> : vector<1x128xf32>
    %94 = tpu.matmul %93, %0, %cst_38 {dimension_numbers = #tpu.dot_dimension_numbers<[1], [0], [0], [1], [0, 0, 1, 1], [], []>} : vector<1x128xbf16>, vector<128x128xbf16>, vector<1x128xf32> -> vector<1x128xf32>
    %c5 = arith.constant 5 : index
    %c0_39 = arith.constant 0 : index
    %95 = vector.load %arg7[%c5, %c0_39] : memref<8x128xf32, #tpu.memory_space<vmem>>, vector<1x128xf32>
    %96 = arith.addf %95, %94 : vector<1x128xf32>
    %97 = math.tanh %96 : vector<1x128xf32>
    %98 = arith.mulf %97, %9 : vector<1x128xf32>
    %99 = arith.addf %98, %12 : vector<1x128xf32>
    %c96_i32_40 = arith.constant 96 : i32
    %100 = tpu.dynamic_rotate %99 by %c96_i32_40 dim 1 : vector<1x128xf32>, i32 -> vector<1x128xf32>
    %c64_i32_41 = arith.constant 64 : i32
    %101 = tpu.dynamic_rotate %99 by %c64_i32_41 dim 1 : vector<1x128xf32>, i32 -> vector<1x128xf32>
    %c32_i32_42 = arith.constant 32 : i32
    %102 = tpu.dynamic_rotate %99 by %c32_i32_42 dim 1 : vector<1x128xf32>, i32 -> vector<1x128xf32>
    %103 = arith.mulf %100, %90 : vector<1x128xf32>
    %104 = arith.mulf %99, %101 : vector<1x128xf32>
    %105 = arith.addf %103, %104 : vector<1x128xf32>
    %106 = math.tanh %105 : vector<1x128xf32>
    %107 = arith.mulf %102, %106 : vector<1x128xf32>
    %108 = arith.truncf %107 : vector<1x128xf32> to vector<1x128xbf16>
    %cst_43 = arith.constant dense<0.000000e+00> : vector<1x128xf32>
    %109 = tpu.matmul %108, %0, %cst_43 {dimension_numbers = #tpu.dot_dimension_numbers<[1], [0], [0], [1], [0, 0, 1, 1], [], []>} : vector<1x128xbf16>, vector<128x128xbf16>, vector<1x128xf32> -> vector<1x128xf32>
    %c6 = arith.constant 6 : index
    %c0_44 = arith.constant 0 : index
    %110 = vector.load %arg7[%c6, %c0_44] : memref<8x128xf32, #tpu.memory_space<vmem>>, vector<1x128xf32>
    %111 = arith.addf %110, %109 : vector<1x128xf32>
    %112 = math.tanh %111 : vector<1x128xf32>
    %113 = arith.mulf %112, %9 : vector<1x128xf32>
    %114 = arith.addf %113, %12 : vector<1x128xf32>
    %c96_i32_45 = arith.constant 96 : i32
    %115 = tpu.dynamic_rotate %114 by %c96_i32_45 dim 1 : vector<1x128xf32>, i32 -> vector<1x128xf32>
    %c64_i32_46 = arith.constant 64 : i32
    %116 = tpu.dynamic_rotate %114 by %c64_i32_46 dim 1 : vector<1x128xf32>, i32 -> vector<1x128xf32>
    %c32_i32_47 = arith.constant 32 : i32
    %117 = tpu.dynamic_rotate %114 by %c32_i32_47 dim 1 : vector<1x128xf32>, i32 -> vector<1x128xf32>
    %118 = arith.mulf %115, %105 : vector<1x128xf32>
    %119 = arith.mulf %114, %116 : vector<1x128xf32>
    %120 = arith.addf %118, %119 : vector<1x128xf32>
    %121 = math.tanh %120 : vector<1x128xf32>
    %122 = arith.mulf %117, %121 : vector<1x128xf32>
    %123 = arith.truncf %122 : vector<1x128xf32> to vector<1x128xbf16>
    %cst_48 = arith.constant dense<0.000000e+00> : vector<1x128xf32>
    %124 = tpu.matmul %123, %0, %cst_48 {dimension_numbers = #tpu.dot_dimension_numbers<[1], [0], [0], [1], [0, 0, 1, 1], [], []>} : vector<1x128xbf16>, vector<128x128xbf16>, vector<1x128xf32> -> vector<1x128xf32>
    %c7 = arith.constant 7 : index
    %c0_49 = arith.constant 0 : index
    %125 = vector.load %arg7[%c7, %c0_49] : memref<8x128xf32, #tpu.memory_space<vmem>>, vector<1x128xf32>
    %126 = arith.addf %125, %124 : vector<1x128xf32>
    %127 = math.tanh %126 : vector<1x128xf32>
    %128 = arith.mulf %127, %9 : vector<1x128xf32>
    %129 = arith.addf %128, %12 : vector<1x128xf32>
    %c96_i32_50 = arith.constant 96 : i32
    %130 = tpu.dynamic_rotate %129 by %c96_i32_50 dim 1 : vector<1x128xf32>, i32 -> vector<1x128xf32>
    %c64_i32_51 = arith.constant 64 : i32
    %131 = tpu.dynamic_rotate %129 by %c64_i32_51 dim 1 : vector<1x128xf32>, i32 -> vector<1x128xf32>
    %c32_i32_52 = arith.constant 32 : i32
    %132 = tpu.dynamic_rotate %129 by %c32_i32_52 dim 1 : vector<1x128xf32>, i32 -> vector<1x128xf32>
    %133 = arith.mulf %130, %120 : vector<1x128xf32>
    %134 = arith.mulf %129, %131 : vector<1x128xf32>
    %135 = arith.addf %133, %134 : vector<1x128xf32>
    %136 = math.tanh %135 : vector<1x128xf32>
    %137 = arith.mulf %132, %136 : vector<1x128xf32>
    %138 = arith.truncf %137 : vector<1x128xf32> to vector<1x128xbf16>
    %c0_53 = arith.constant 0 : index
    %c0_54 = arith.constant 0 : index
    %139 = vector.load %arg4[%c0_53, %c0_54] : memref<128x4xbf16, #tpu.memory_space<vmem>>, vector<128x4xbf16>
    %cst_55 = arith.constant dense<0.000000e+00> : vector<1x4xf32>
    %140 = tpu.matmul %138, %139, %cst_55 {dimension_numbers = #tpu.dot_dimension_numbers<[1], [0], [0], [1], [0, 0, 1, 1], [], []>} : vector<1x128xbf16>, vector<128x4xbf16>, vector<1x4xf32> -> vector<1x4xf32>
    %c0_56 = arith.constant 0 : index
    %c0_57 = arith.constant 0 : index
    %141 = vector.load %arg5[%c0_56, %c0_57] : memref<1x4xf32, #tpu.memory_space<vmem>>, vector<1x4xf32>
    %142 = arith.addf %140, %141 : vector<1x4xf32>
    %c0_58 = arith.constant 0 : index
    %c0_59 = arith.constant 0 : index
    %143 = vector.load %arg6[%c0_58, %c0_59] : memref<1x4xf32, #tpu.memory_space<vmem>>, vector<1x4xf32>
    tpu.vector_store %arg6[%c0_58, %c0_59], %142 {strides = array<i32>} : memref<1x4xf32, #tpu.memory_space<vmem>>, vector<1x4xf32>,
    return
  }
}

</mosaic_0001>

<llo_original>
// kernel: tpu_custom_call.1
$region0: #{tpu_custom_call.1}
  #allocation0 [shape = 'u32[]', space=smem, size = 0x4, offset = 0x4, fixed_abs, tag = 'smem constant byte address 0x4 - core index']
  #allocation1 [shape = 'u32[144,128]{1,0:T(1,128)}', space=vmem, size = 0x12000, scoped, tag = 'internal scratch']
  #allocation2 [shape = 'f32[8,128]{1,0:T(8,128)}', space=vmem, size = 0x1000, scoped, tag = 'scratch operand']
  %s0 = inlined_call_operand.vmem [shape: bf16[8,8], index: 0, kind: input, shape index: {}]
  %s1 = inlined_call_operand.hbm [shape: bf16[8,128], index: 1, kind: input, shape index: {}]
  %s2 = inlined_call_operand.vmem [shape: bf16[128,128], index: 2, kind: input, shape index: {}]
  %s3 = inlined_call_operand.vmem [shape: f32[1,128], index: 3, kind: input, shape index: {}]
  %s4 = inlined_call_operand.vmem [shape: bf16[128,4], index: 4, kind: input, shape index: {}]
  %s5 = inlined_call_operand.vmem [shape: f32[1,4], index: 5, kind: input, shape index: {}]
  %s6 = inlined_call_operand.hbm [shape: f32[1,4], index: 6, kind: output, shape index: {}]
  %s7 = sld [smem:[#allocation0]]
  $region38: #{tpu_custom_call.1} parent=0
    _
  %s9 = ssub.s32 1, %s7
  %s10 = scalar_select 0, %s9, %s7
  $region1: #{tpu_custom_call.1} parent=0
    #allocation3 [shape = 'u8[2048]{0}', space=vmem, size = 0x800, scoped, tag = 'input window, operand 1, single buffered']
    #allocation4 [shape = 's32[1]{0}', space=sflag, size = 0x4, scoped, tag = 'scoped memory for tpu_custom_call.1']
    #allocation5 [shape = 's32[1]{0}', space=sflag, size = 0x4, scoped, tag = 'scoped memory for tpu_custom_call.1']
    #allocation6 [shape = 'u8[512]{0}', space=vmem, size = 0x400, scoped, tag = 'output window, operand 0, single buffered']
    %11 = vsyncpa [#allocation4], 0
    %12 = vsyncpa [#allocation5], 0
    // Predicated region
    $region2: #{tpu_custom_call.1} parent=1 // pred_check
      _
    $region3: #{tpu_custom_call.1} parent=1 // pred_check_branch
      %14 = sbr.rel (0) target = $region5
    $region4: #{tpu_custom_call.1} parent=1 // pred_region
      _
    $region5: #{tpu_custom_call.1} parent=1 // pred_fallthru
      _
    // Predicated region
    $region6: #{tpu_custom_call.1} parent=1 // pred_check
      _
    $region7: #{tpu_custom_call.1} parent=1 // pred_check_branch
      %16 = sbr.rel (0) target = $region9
    $region8: #{tpu_custom_call.1} parent=1 // pred_region
      %s18 = ssub.s32 64, 64
      %19 = vsyncadd [#allocation4], %s18
      %s21 = sshll.u32 [#allocation3], 4
      %s22 = int_to_ptr.vmem [resolvable:$true] %s21
      %24 = dma.hbm_to_vmem [thread:$0]  %s1, 64, %s22, [#allocation4]
    $region9: #{tpu_custom_call.1} parent=1 // pred_fallthru
      _
    // Predicated region
    $region10: #{tpu_custom_call.1} parent=1 // pred_check
      _
    $region11: #{tpu_custom_call.1} parent=1 // pred_check_branch
      %26 = sbr.rel (0) target = $region13
    $region12: #{tpu_custom_call.1} parent=1 // pred_region
      _
    $region13: #{tpu_custom_call.1} parent=1 // pred_fallthru
      _
    // Predicated region
    $region14: #{tpu_custom_call.1} parent=1 // pred_check
      _
    $region15: #{tpu_custom_call.1} parent=1 // pred_check_branch
      %28 = sbr.rel (0) target = $region17
    $region16: #{tpu_custom_call.1} parent=1 // pred_region
      _
    $region17: #{tpu_custom_call.1} parent=1 // pred_fallthru
      _
    // Predicated region
    $region18: #{tpu_custom_call.1} parent=1 // pred_check
      _
    $region19: #{tpu_custom_call.1} parent=1 // pred_check_branch
      %30 = sbr.rel (0) target = $region21
    $region20: #{tpu_custom_call.1} parent=1 // pred_region
      _
    $region21: #{tpu_custom_call.1} parent=1 // pred_fallthru
      _
    // Predicated region
    $region22: #{tpu_custom_call.1} parent=1 // pred_check
      _
    $region23: #{tpu_custom_call.1} parent=1 // pred_check_branch
      %32 = sbr.rel (0) target = $region25
    $region24: #{tpu_custom_call.1} parent=1 // pred_region
      _
    $region25: #{tpu_custom_call.1} parent=1 // pred_fallthru
      _
    // Predicated region
    $region26: #{tpu_custom_call.1} parent=1 // pred_check
      _
    $region27: #{tpu_custom_call.1} parent=1 // pred_check_branch
      %34 = sbr.rel (0) target = $region29
    $region28: #{tpu_custom_call.1} parent=1 // pred_region
      %35 = dma.done [#allocation4], 64
    $region29: #{tpu_custom_call.1} parent=1 // pred_fallthru
      _
    %v37 = vld [vmem:[%s2] sm:$0xf]
    %v38 = vld [vmem:[%s2 + $0x4] sm:$0xf]
    %v39 = vld [vmem:[%s2 + $0x8] sm:$0xf]
    %v40 = vld [vmem:[%s2 + $0xc] sm:$0xf]
    %v41 = vld [vmem:[%s2 + $0x10] sm:$0xf]
    %v42 = vld [vmem:[%s2 + $0x14] sm:$0xf]
    %v43 = vld [vmem:[%s2 + $0x18] sm:$0xf]
    %v44 = vld [vmem:[%s2 + $0x1c] sm:$0xf]
    %v45 = vld [vmem:[%s2 + $0x20] sm:$0xf]
    %v46 = vld [vmem:[%s2 + $0x24] sm:$0xf]
    %v47 = vld [vmem:[%s2 + $0x28] sm:$0xf]
    %v48 = vld [vmem:[%s2 + $0x2c] sm:$0xf]
    %v49 = vld [vmem:[%s2 + $0x30] sm:$0xf]
    %v50 = vld [vmem:[%s2 + $0x34] sm:$0xf]
    %v51 = vld [vmem:[%s2 + $0x38] sm:$0xf]
    %v52 = vld [vmem:[%s2 + $0x3c] sm:$0xf]
    %v53 = vlaneseq
    %v54 = vand.u32 %v53, 127
    %vm55 = vcmp.ge.s32.totalorder %v54, 64
    %vm56 = vcmp.lt.s32.totalorder %v54, 96
    %vm57 = vmand %vm55, %vm56
    %v58 = vsel %vm57, 1.0, 0.5
    %v59 = vsel %vm57, 0.0, 0.5
    %v60 = vld [vmem:[%s0] sm:$0xf]
    %v61 = vld [vmem:[#allocation3] sm:$0xf]
    %v62 = vld [vmem:[%s3] sm:$0x1]
    %v64 = vlaneseq
    %v65 = vshrl.u32 %v64, 7
    %v66 = vsub.s32 0, %v65
    %v67 = vrot.slane %v62, %v66
    %vm69 = vcmask 64512
    %v71 = vsel %vm69, %v60, 0
    %vm73 = vcmask 1043456
    %v75 = vsel %vm73, %v61, 0
    %77 = vmatprep.subr.bf16.mxu0 0
    %78 = vmatpush1.bf16.msra.mxu0 0
    %79 = vmatprep.subr.bf16.mxu0 0
    %80 = vmatpush1.bf16.msra.mxu0 0
    %81 = vmatprep.subr.bf16.mxu0 0
    %82 = vmatpush1.bf16.msra.mxu0 0
    %83 = vmatprep.subr.bf16.mxu0 0
    %84 = vmatpush1.bf16.msra.mxu0 0
    %85 = vmatprep.subr.bf16.mxu0 0
    %86 = vmatpush1.bf16.msra.mxu0 0
    %87 = vmatprep.subr.bf16.mxu0 0
    %88 = vmatpush1.bf16.msra.mxu0 0
    %89 = vmatprep.subr.bf16.mxu0 0
    %90 = vmatpush1.bf16.msra.mxu0 0
    %91 = vmatprep.subr.bf16.mxu0 0
    %92 = vmatpush1.bf16.msra.mxu0 %v75
    %93 = vmatprep.subr.bf16.mxu0 0
    %94 = vmatpush2.bf16.msra.mxu0 0
    %95 = vmatprep.subr.bf16.mxu0 0
    %96 = vmatpush2.bf16.msra.mxu0 0
    %97 = vmatprep.subr.bf16.mxu0 0
    %98 = vmatpush2.bf16.msra.mxu0 0
    %99 = vmatprep.subr.bf16.mxu0 0
    %100 = vmatpush2.bf16.msra.mxu0 0
    %101 = vmatprep.subr.bf16.mxu0 0
    %102 = vmatpush2.bf16.msra.mxu0 0
    %103 = vmatprep.subr.bf16.mxu0 0
    %104 = vmatpush2.bf16.msra.mxu0 0
    %105 = vmatprep.subr.bf16.mxu0 0
    %106 = vmatpush2.bf16.msra.mxu0 0
    %107 = vmatprep.subr.bf16.mxu0 0
    %108 = vmatpush2.bf16.msra.mxu0 0
    %109 = vmatprep.mubr.bf16.mxu0 0
    %110 = vmatmul.mubr.bf16.gmra.mxu0 %v71
    %v111 = vpop.f32.mrf.mxu0
    %v112 = vadd.f32 %v67, %v111
    %v113 = vpop.f32.mrf.mxu0
    %v114 = vpop.f32.mrf.mxu0
    %v115 = vpop.f32.mrf.mxu0
    %116 = vdwg.mxu0
    %117 = vst [vmem:[#allocation2] sm:$0xff] %v112
    %v118 = vld [vmem:[#allocation2] sm:$0x1]
    %v119 = vtanh.pop %v118
    %v120 = vmul.f32 %v119, %v58
    %v121 = vadd.f32 %v120, %v59
    %122 = vrot.lane.b32.xlu0 %v121, 96
    %v123 = vpop.permute.xlu0 %122
    %124 = vrot.lane.b32.xlu0 %v121, 64
    %v125 = vpop.permute.xlu0 %124
    %126 = vrot.lane.b32.xlu0 %v121, 32
    %v127 = vpop.permute.xlu0 %126
    %v128 = vmul.f32 %v123, 0.0
    %v129 = vmul.f32 %v121, %v125
    %v130 = vadd.f32 %v128, %v129
    %v131 = vtanh.pop %v130
    %v132 = vmul.f32 %v127, %v131
    %v133 = vpack.c.bf16 %v132, %v132
    %v150 = vunpack.c.l.b16 %v37
    %v151 = vunpack.c.l.b16 %v38
    %v152 = vunpack.c.l.b16 %v39
    %v153 = vunpack.c.l.b16 %v40
    %v154 = vunpack.c.l.b16 %v41
    %v155 = vunpack.c.l.b16 %v42
    %v156 = vunpack.c.l.b16 %v43
    %v157 = vunpack.c.l.b16 %v44
    %v158 = vunpack.c.l.b16 %v45
    %v159 = vunpack.c.l.b16 %v46
    %v160 = vunpack.c.l.b16 %v47
    %v161 = vunpack.c.l.b16 %v48
    %v162 = vunpack.c.l.b16 %v49
    %v163 = vunpack.c.l.b16 %v50
    %v164 = vunpack.c.l.b16 %v51
    %v165 = vunpack.c.l.b16 %v52
    %v166 = vpack.c.b16 %v151, %v150
    %v167 = vpack.c.b16 %v153, %v152
    %v168 = vpack.c.b16 %v155, %v154
    %v169 = vpack.c.b16 %v157, %v156
    %v170 = vpack.c.b16 %v159, %v158
    %v171 = vpack.c.b16 %v161, %v160
    %v172 = vpack.c.b16 %v163, %v162
    %v173 = vpack.c.b16 %v165, %v164
    %182 = vmatprep.subr.bf16.mxu0 0
    %183 = vmatpush1.bf16.msra.mxu0 %v173
    %184 = vmatprep.subr.bf16.mxu0 0
    %185 = vmatpush1.bf16.msra.mxu0 %v172
    %186 = vmatprep.subr.bf16.mxu0 0
    %187 = vmatpush1.bf16.msra.mxu0 %v171
    %188 = vmatprep.subr.bf16.mxu0 0
    %189 = vmatpush1.bf16.msra.mxu0 %v170
    %190 = vmatprep.subr.bf16.mxu0 0
    %191 = vmatpush1.bf16.msra.mxu0 %v169
    %192 = vmatprep.subr.bf16.mxu0 0
    %193 = vmatpush1.bf16.msra.mxu0 %v168
    %194 = vmatprep.subr.bf16.mxu0 0
    %195 = vmatpush1.bf16.msra.mxu0 %v167
    %196 = vmatprep.subr.bf16.mxu0 0
    %197 = vmatpush1.bf16.msra.mxu0 %v166
    %198 = vmatprep.subr.bf16.mxu0 0
    %199 = vmatpush2.bf16.msra.mxu0 0
    %200 = vmatprep.subr.bf16.mxu0 0
    %201 = vmatpush2.bf16.msra.mxu0 0
    %202 = vmatprep.subr.bf16.mxu0 0
    %203 = vmatpush2.bf16.msra.mxu0 0
    %204 = vmatprep.subr.bf16.mxu0 0
    %205 = vmatpush2.bf16.msra.mxu0 0
    %206 = vmatprep.subr.bf16.mxu0 0
    %207 = vmatpush2.bf16.msra.mxu0 0
    %208 = vmatprep.subr.bf16.mxu0 0
    %209 = vmatpush2.bf16.msra.mxu0 0
    %210 = vmatprep.subr.bf16.mxu0 0
    %211 = vmatpush2.bf16.msra.mxu0 0
    %212 = vmatprep.subr.bf16.mxu0 0
    %213 = vmatpush2.bf16.msra.mxu0 0
    %214 = vmatprep.mubr.bf16.mxu0 0
    %215 = vmatmul.mubr.bf16.gmra.mxu0 %v133
    %v216 = vpop.f32.mrf.mxu0
    %v217 = vadd.f32 0.0, %v216
    %v218 = vpop.f32.mrf.mxu0
    %v219 = vpop.f32.mrf.mxu0
    %v220 = vpop.f32.mrf.mxu0
    %221 = vdwg.mxu0
    %v222 = vld [vmem:[#allocation2 + $0x1] sm:$0x1]
    %v223 = vadd.f32 %v222, %v217
    %v224 = vtanh.pop %v223
    %v225 = vmul.f32 %v224, %v58
    %v226 = vadd.f32 %v225, %v59
    %227 = vrot.lane.b32.xlu0 %v226, 96
    %v228 = vpop.permute.xlu0 %227
    %229 = vrot.lane.b32.xlu0 %v226, 64
    %v230 = vpop.permute.xlu0 %229
    %231 = vrot.lane.b32.xlu0 %v226, 32
    %v232 = vpop.permute.xlu0 %231
    %v233 = vmul.f32 %v228, %v130
    %v234 = vmul.f32 %v226, %v230
    %v235 = vadd.f32 %v233, %v234
    %v236 = vtanh.pop %v235
    %v237 = vmul.f32 %v232, %v236
    %v238 = vpack.c.bf16 %v237, %v237
    %239 = vmatprep.subr.bf16.mxu0 0
    %240 = vmatpush1.bf16.msra.mxu0 %v173
    %241 = vmatprep.subr.bf16.mxu0 0
    %242 = vmatpush1.bf16.msra.mxu0 %v172
    %243 = vmatprep.subr.bf16.mxu0 0
    %244 = vmatpush1.bf16.msra.mxu0 %v171
    %245 = vmatprep.subr.bf16.mxu0 0
    %246 = vmatpush1.bf16.msra.mxu0 %v170
    %247 = vmatprep.subr.bf16.mxu0 0
    %248 = vmatpush1.bf16.msra.mxu0 %v169
    %249 = vmatprep.subr.bf16.mxu0 0
    %250 = vmatpush1.bf16.msra.mxu0 %v168
    %251 = vmatprep.subr.bf16.mxu0 0
    %252 = vmatpush1.bf16.msra.mxu0 %v167
    %253 = vmatprep.subr.bf16.mxu0 0
    %254 = vmatpush1.bf16.msra.mxu0 %v166
    %255 = vmatprep.subr.bf16.mxu0 0
    %256 = vmatpush2.bf16.msra.mxu0 0
    %257 = vmatprep.subr.bf16.mxu0 0
    %258 = vmatpush2.bf16.msra.mxu0 0
    %259 = vmatprep.subr.bf16.mxu0 0
    %260 = vmatpush2.bf16.msra.mxu0 0
    %261 = vmatprep.subr.bf16.mxu0 0
    %262 = vmatpush2.bf16.msra.mxu0 0
    %263 = vmatprep.subr.bf16.mxu0 0
    %264 = vmatpush2.bf16.msra.mxu0 0
    %265 = vmatprep.subr.bf16.mxu0 0
    %266 = vmatpush2.bf16.msra.mxu0 0
    %267 = vmatprep.subr.bf16.mxu0 0
    %268 = vmatpush2.bf16.msra.mxu0 0
    %269 = vmatprep.subr.bf16.mxu0 0
    %270 = vmatpush2.bf16.msra.mxu0 0
    %271 = vmatprep.mubr.bf16.mxu0 0
    %272 = vmatmul.mubr.bf16.gmra.mxu0 %v238
    %v273 = vpop.f32.mrf.mxu0
    %v274 = vadd.f32 0.0, %v273
    %v275 = vpop.f32.mrf.mxu0
    %v276 = vpop.f32.mrf.mxu0
    %v277 = vpop.f32.mrf.mxu0
    %278 = vdwg.mxu0
    %v279 = vld [vmem:[#allocation2 + $0x2] sm:$0x1]
    %v280 = vadd.f32 %v279, %v274
    %v281 = vtanh.pop %v280
    %v282 = vmul.f32 %v281, %v58
    %v283 = vadd.f32 %v282, %v59
    %284 = vrot.lane.b32.xlu0 %v283, 96
    %v285 = vpop.permute.xlu0 %284
    %286 = vrot.lane.b32.xlu0 %v283, 64
    %v287 = vpop.permute.xlu0 %286
    %288 = vrot.lane.b32.xlu0 %v283, 32
    %v289 = vpop.permute.xlu0 %288
    %v290 = vmul.f32 %v285, %v235
    %v291 = vmul.f32 %v283, %v287
    %v292 = vadd.f32 %v290, %v291
    %v293 = vtanh.pop %v292
    %v294 = vmul.f32 %v289, %v293
    %v295 = vpack.c.bf16 %v294, %v294
    %296 = vmatprep.subr.bf16.mxu0 0
    %297 = vmatpush1.bf16.msra.mxu0 %v173
    %298 = vmatprep.subr.bf16.mxu0 0
    %299 = vmatpush1.bf16.msra.mxu0 %v172
    %300 = vmatprep.subr.bf16.mxu0 0
    %301 = vmatpush1.bf16.msra.mxu0 %v171
    %302 = vmatprep.subr.bf16.mxu0 0
    %303 = vmatpush1.bf16.msra.mxu0 %v170
    %304 = vmatprep.subr.bf16.mxu0 0
    %305 = vmatpush1.bf16.msra.mxu0 %v169
    %306 = vmatprep.subr.bf16.mxu0 0
    %307 = vmatpush1.bf16.msra.mxu0 %v168
    %308 = vmatprep.subr.bf16.mxu0 0
    %309 = vmatpush1.bf16.msra.mxu0 %v167
    %310 = vmatprep.subr.bf16.mxu0 0
    %311 = vmatpush1.bf16.msra.mxu0 %v166
    %312 = vmatprep.subr.bf16.mxu0 0
    %313 = vmatpush2.bf16.msra.mxu0 0
    %314 = vmatprep.subr.bf16.mxu0 0
    %315 = vmatpush2.bf16.msra.mxu0 0
    %316 = vmatprep.subr.bf16.mxu0 0
    %317 = vmatpush2.bf16.msra.mxu0 0
    %318 = vmatprep.subr.bf16.mxu0 0
    %319 = vmatpush2.bf16.msra.mxu0 0
    %320 = vmatprep.subr.bf16.mxu0 0
    %321 = vmatpush2.bf16.msra.mxu0 0
    %322 = vmatprep.subr.bf16.mxu0 0
    %323 = vmatpush2.bf16.msra.mxu0 0
    %324 = vmatprep.subr.bf16.mxu0 0
    %325 = vmatpush2.bf16.msra.mxu0 0
    %326 = vmatprep.subr.bf16.mxu0 0
    %327 = vmatpush2.bf16.msra.mxu0 0
    %328 = vmatprep.mubr.bf16.mxu0 0
    %329 = vmatmul.mubr.bf16.gmra.mxu0 %v295
    %v330 = vpop.f32.mrf.mxu0
    %v331 = vadd.f32 0.0, %v330
    %v332 = vpop.f32.mrf.mxu0
    %v333 = vpop.f32.mrf.mxu0
    %v334 = vpop.f32.mrf.mxu0
    %335 = vdwg.mxu0
    %v336 = vld [vmem:[#allocation2 + $0x3] sm:$0x1]
    %v337 = vadd.f32 %v336, %v331
    %v338 = vtanh.pop %v337
    %v339 = vmul.f32 %v338, %v58
    %v340 = vadd.f32 %v339, %v59
    %341 = vrot.lane.b32.xlu0 %v340, 96
    %v342 = vpop.permute.xlu0 %341
    %343 = vrot.lane.b32.xlu0 %v340, 64
    %v344 = vpop.permute.xlu0 %343
    %345 = vrot.lane.b32.xlu0 %v340, 32
    %v346 = vpop.permute.xlu0 %345
    %v347 = vmul.f32 %v342, %v292
    %v348 = vmul.f32 %v340, %v344
    %v349 = vadd.f32 %v347, %v348
    %v350 = vtanh.pop %v349
    %v351 = vmul.f32 %v346, %v350
    %v352 = vpack.c.bf16 %v351, %v351
    %353 = vmatprep.subr.bf16.mxu0 0
    %354 = vmatpush1.bf16.msra.mxu0 %v173
    %355 = vmatprep.subr.bf16.mxu0 0
    %356 = vmatpush1.bf16.msra.mxu0 %v172
    %357 = vmatprep.subr.bf16.mxu0 0
    %358 = vmatpush1.bf16.msra.mxu0 %v171
    %359 = vmatprep.subr.bf16.mxu0 0
    %360 = vmatpush1.bf16.msra.mxu0 %v170
    %361 = vmatprep.subr.bf16.mxu0 0
    %362 = vmatpush1.bf16.msra.mxu0 %v169
    %363 = vmatprep.subr.bf16.mxu0 0
    %364 = vmatpush1.bf16.msra.mxu0 %v168
    %365 = vmatprep.subr.bf16.mxu0 0
    %366 = vmatpush1.bf16.msra.mxu0 %v167
    %367 = vmatprep.subr.bf16.mxu0 0
    %368 = vmatpush1.bf16.msra.mxu0 %v166
    %369 = vmatprep.subr.bf16.mxu0 0
    %370 = vmatpush2.bf16.msra.mxu0 0
    %371 = vmatprep.subr.bf16.mxu0 0
    %372 = vmatpush2.bf16.msra.mxu0 0
    %373 = vmatprep.subr.bf16.mxu0 0
    %374 = vmatpush2.bf16.msra.mxu0 0
    %375 = vmatprep.subr.bf16.mxu0 0
    %376 = vmatpush2.bf16.msra.mxu0 0
    %377 = vmatprep.subr.bf16.mxu0 0
    %378 = vmatpush2.bf16.msra.mxu0 0
    %379 = vmatprep.subr.bf16.mxu0 0
    %380 = vmatpush2.bf16.msra.mxu0 0
    %381 = vmatprep.subr.bf16.mxu0 0
    %382 = vmatpush2.bf16.msra.mxu0 0
    %383 = vmatprep.subr.bf16.mxu0 0
    %384 = vmatpush2.bf16.msra.mxu0 0
    %385 = vmatprep.mubr.bf16.mxu0 0
    %386 = vmatmul.mubr.bf16.gmra.mxu0 %v352
    %v387 = vpop.f32.mrf.mxu0
    %v388 = vadd.f32 0.0, %v387
    %v389 = vpop.f32.mrf.mxu0
    %v390 = vpop.f32.mrf.mxu0
    %v391 = vpop.f32.mrf.mxu0
    %392 = vdwg.mxu0
    %v393 = vld [vmem:[#allocation2 + $0x4] sm:$0x1]
    %v394 = vadd.f32 %v393, %v388
    %v395 = vtanh.pop %v394
    %v396 = vmul.f32 %v395, %v58
    %v397 = vadd.f32 %v396, %v59
    %398 = vrot.lane.b32.xlu0 %v397, 96
    %v399 = vpop.permute.xlu0 %398
    %400 = vrot.lane.b32.xlu0 %v397, 64
    %v401 = vpop.permute.xlu0 %400
    %402 = vrot.lane.b32.xlu0 %v397, 32
    %v403 = vpop.permute.xlu0 %402
    %v404 = vmul.f32 %v399, %v349
    %v405 = vmul.f32 %v397, %v401
    %v406 = vadd.f32 %v404, %v405
    %v407 = vtanh.pop %v406
    %v408 = vmul.f32 %v403, %v407
    %v409 = vpack.c.bf16 %v408, %v408
    %410 = vmatprep.subr.bf16.mxu0 0
    %411 = vmatpush1.bf16.msra.mxu0 %v173
    %412 = vmatprep.subr.bf16.mxu0 0
    %413 = vmatpush1.bf16.msra.mxu0 %v172
    %414 = vmatprep.subr.bf16.mxu0 0
    %415 = vmatpush1.bf16.msra.mxu0 %v171
    %416 = vmatprep.subr.bf16.mxu0 0
    %417 = vmatpush1.bf16.msra.mxu0 %v170
    %418 = vmatprep.subr.bf16.mxu0 0
    %419 = vmatpush1.bf16.msra.mxu0 %v169
    %420 = vmatprep.subr.bf16.mxu0 0
    %421 = vmatpush1.bf16.msra.mxu0 %v168
    %422 = vmatprep.subr.bf16.mxu0 0
    %423 = vmatpush1.bf16.msra.mxu0 %v167
    %424 = vmatprep.subr.bf16.mxu0 0
    %425 = vmatpush1.bf16.msra.mxu0 %v166
    %426 = vmatprep.subr.bf16.mxu0 0
    %427 = vmatpush2.bf16.msra.mxu0 0
    %428 = vmatprep.subr.bf16.mxu0 0
    %429 = vmatpush2.bf16.msra.mxu0 0
    %430 = vmatprep.subr.bf16.mxu0 0
    %431 = vmatpush2.bf16.msra.mxu0 0
    %432 = vmatprep.subr.bf16.mxu0 0
    %433 = vmatpush2.bf16.msra.mxu0 0
    %434 = vmatprep.subr.bf16.mxu0 0
    %435 = vmatpush2.bf16.msra.mxu0 0
    %436 = vmatprep.subr.bf16.mxu0 0
    %437 = vmatpush2.bf16.msra.mxu0 0
    %438 = vmatprep.subr.bf16.mxu0 0
    %439 = vmatpush2.bf16.msra.mxu0 0
    %440 = vmatprep.subr.bf16.mxu0 0
    %441 = vmatpush2.bf16.msra.mxu0 0
    %442 = vmatprep.mubr.bf16.mxu0 0
    %443 = vmatmul.mubr.bf16.gmra.mxu0 %v409
    %v444 = vpop.f32.mrf.mxu0
    %v445 = vadd.f32 0.0, %v444
    %v446 = vpop.f32.mrf.mxu0
    %v447 = vpop.f32.mrf.mxu0
    %v448 = vpop.f32.mrf.mxu0
    %449 = vdwg.mxu0
    %v450 = vld [vmem:[#allocation2 + $0x5] sm:$0x1]
    %v451 = vadd.f32 %v450, %v445
    %v452 = vtanh.pop %v451
    %v453 = vmul.f32 %v452, %v58
    %v454 = vadd.f32 %v453, %v59
    %455 = vrot.lane.b32.xlu0 %v454, 96
    %v456 = vpop.permute.xlu0 %455
    %457 = vrot.lane.b32.xlu0 %v454, 64
    %v458 = vpop.permute.xlu0 %457
    %459 = vrot.lane.b32.xlu0 %v454, 32
    %v460 = vpop.permute.xlu0 %459
    %v461 = vmul.f32 %v456, %v406
    %v462 = vmul.f32 %v454, %v458
    %v463 = vadd.f32 %v461, %v462
    %v464 = vtanh.pop %v463
    %v465 = vmul.f32 %v460, %v464
    %v466 = vpack.c.bf16 %v465, %v465
    %467 = vmatprep.subr.bf16.mxu0 0
    %468 = vmatpush1.bf16.msra.mxu0 %v173
    %469 = vmatprep.subr.bf16.mxu0 0
    %470 = vmatpush1.bf16.msra.mxu0 %v172
    %471 = vmatprep.subr.bf16.mxu0 0
    %472 = vmatpush1.bf16.msra.mxu0 %v171
    %473 = vmatprep.subr.bf16.mxu0 0
    %474 = vmatpush1.bf16.msra.mxu0 %v170
    %475 = vmatprep.subr.bf16.mxu0 0
    %476 = vmatpush1.bf16.msra.mxu0 %v169
    %477 = vmatprep.subr.bf16.mxu0 0
    %478 = vmatpush1.bf16.msra.mxu0 %v168
    %479 = vmatprep.subr.bf16.mxu0 0
    %480 = vmatpush1.bf16.msra.mxu0 %v167
    %481 = vmatprep.subr.bf16.mxu0 0
    %482 = vmatpush1.bf16.msra.mxu0 %v166
    %483 = vmatprep.subr.bf16.mxu0 0
    %484 = vmatpush2.bf16.msra.mxu0 0
    %485 = vmatprep.subr.bf16.mxu0 0
    %486 = vmatpush2.bf16.msra.mxu0 0
    %487 = vmatprep.subr.bf16.mxu0 0
    %488 = vmatpush2.bf16.msra.mxu0 0
    %489 = vmatprep.subr.bf16.mxu0 0
    %490 = vmatpush2.bf16.msra.mxu0 0
    %491 = vmatprep.subr.bf16.mxu0 0
    %492 = vmatpush2.bf16.msra.mxu0 0
    %493 = vmatprep.subr.bf16.mxu0 0
    %494 = vmatpush2.bf16.msra.mxu0 0
    %495 = vmatprep.subr.bf16.mxu0 0
    %496 = vmatpush2.bf16.msra.mxu0 0
    %497 = vmatprep.subr.bf16.mxu0 0
    %498 = vmatpush2.bf16.msra.mxu0 0
    %499 = vmatprep.mubr.bf16.mxu0 0
    %500 = vmatmul.mubr.bf16.gmra.mxu0 %v466
    %v501 = vpop.f32.mrf.mxu0
    %v502 = vadd.f32 0.0, %v501
    %v503 = vpop.f32.mrf.mxu0
    %v504 = vpop.f32.mrf.mxu0
    %v505 = vpop.f32.mrf.mxu0
    %506 = vdwg.mxu0
    %v507 = vld [vmem:[#allocation2 + $0x6] sm:$0x1]
    %v508 = vadd.f32 %v507, %v502
    %v509 = vtanh.pop %v508
    %v510 = vmul.f32 %v509, %v58
    %v511 = vadd.f32 %v510, %v59
    %512 = vrot.lane.b32.xlu0 %v511, 96
    %v513 = vpop.permute.xlu0 %512
    %514 = vrot.lane.b32.xlu0 %v511, 64
    %v515 = vpop.permute.xlu0 %514
    %516 = vrot.lane.b32.xlu0 %v511, 32
    %v517 = vpop.permute.xlu0 %516
    %v518 = vmul.f32 %v513, %v463
    %v519 = vmul.f32 %v511, %v515
    %v520 = vadd.f32 %v518, %v519
    %v521 = vtanh.pop %v520
    %v522 = vmul.f32 %v517, %v521
    %v523 = vpack.c.bf16 %v522, %v522
    %524 = vmatprep.subr.bf16.mxu0 0
    %525 = vmatpush1.bf16.msra.mxu0 %v173
    %526 = vmatprep.subr.bf16.mxu0 0
    %527 = vmatpush1.bf16.msra.mxu0 %v172
    %528 = vmatprep.subr.bf16.mxu0 0
    %529 = vmatpush1.bf16.msra.mxu0 %v171
    %530 = vmatprep.subr.bf16.mxu0 0
    %531 = vmatpush1.bf16.msra.mxu0 %v170
    %532 = vmatprep.subr.bf16.mxu0 0
    %533 = vmatpush1.bf16.msra.mxu0 %v169
    %534 = vmatprep.subr.bf16.mxu0 0
    %535 = vmatpush1.bf16.msra.mxu0 %v168
    %536 = vmatprep.subr.bf16.mxu0 0
    %537 = vmatpush1.bf16.msra.mxu0 %v167
    %538 = vmatprep.subr.bf16.mxu0 0
    %539 = vmatpush1.bf16.msra.mxu0 %v166
    %540 = vmatprep.subr.bf16.mxu0 0
    %541 = vmatpush2.bf16.msra.mxu0 0
    %542 = vmatprep.subr.bf16.mxu0 0
    %543 = vmatpush2.bf16.msra.mxu0 0
    %544 = vmatprep.subr.bf16.mxu0 0
    %545 = vmatpush2.bf16.msra.mxu0 0
    %546 = vmatprep.subr.bf16.mxu0 0
    %547 = vmatpush2.bf16.msra.mxu0 0
    %548 = vmatprep.subr.bf16.mxu0 0
    %549 = vmatpush2.bf16.msra.mxu0 0
    %550 = vmatprep.subr.bf16.mxu0 0
    %551 = vmatpush2.bf16.msra.mxu0 0
    %552 = vmatprep.subr.bf16.mxu0 0
    %553 = vmatpush2.bf16.msra.mxu0 0
    %554 = vmatprep.subr.bf16.mxu0 0
    %555 = vmatpush2.bf16.msra.mxu0 0
    %556 = vmatprep.mubr.bf16.mxu0 0
    %557 = vmatmul.mubr.bf16.gmra.mxu0 %v523
    %v558 = vpop.f32.mrf.mxu0
    %v559 = vadd.f32 0.0, %v558
    %v560 = vpop.f32.mrf.mxu0
    %v561 = vpop.f32.mrf.mxu0
    %v562 = vpop.f32.mrf.mxu0
    %563 = vdwg.mxu0
    %v564 = vld [vmem:[#allocation2 + $0x7] sm:$0x1]
    %v565 = vadd.f32 %v564, %v559
    %v566 = vtanh.pop %v565
    %v567 = vmul.f32 %v566, %v58
    %v568 = vadd.f32 %v567, %v59
    %569 = vrot.lane.b32.xlu0 %v568, 96
    %v570 = vpop.permute.xlu0 %569
    %571 = vrot.lane.b32.xlu0 %v568, 64
    %v572 = vpop.permute.xlu0 %571
    %573 = vrot.lane.b32.xlu0 %v568, 32
    %v574 = vpop.permute.xlu0 %573
    %v575 = vmul.f32 %v570, %v520
    %v576 = vmul.f32 %v568, %v572
    %v577 = vadd.f32 %v575, %v576
    %v578 = vtanh.pop %v577
    %v579 = vmul.f32 %v574, %v578
    %v580 = vpack.c.bf16 %v579, %v579
    %v581 = vld [vmem:[%s4] sm:$0xf]
    %v582 = vld [vmem:[%s4 + $0x4] sm:$0xf]
    %v583 = vld [vmem:[%s4 + $0x8] sm:$0xf]
    %v584 = vld [vmem:[%s4 + $0xc] sm:$0xf]
    %v585 = vld [vmem:[%s4 + $0x10] sm:$0xf]
    %v586 = vld [vmem:[%s4 + $0x14] sm:$0xf]
    %v587 = vld [vmem:[%s4 + $0x18] sm:$0xf]
    %v588 = vld [vmem:[%s4 + $0x1c] sm:$0xf]
    %v589 = vld [vmem:[%s4 + $0x20] sm:$0xf]
    %v590 = vld [vmem:[%s4 + $0x24] sm:$0xf]
    %v591 = vld [vmem:[%s4 + $0x28] sm:$0xf]
    %v592 = vld [vmem:[%s4 + $0x2c] sm:$0xf]
    %v593 = vld [vmem:[%s4 + $0x30] sm:$0xf]
    %v594 = vld [vmem:[%s4 + $0x34] sm:$0xf]
    %v595 = vld [vmem:[%s4 + $0x38] sm:$0xf]
    %v596 = vld [vmem:[%s4 + $0x3c] sm:$0xf]
    %v597 = vld [vmem:[%s5] sm:$0x1]
    %v614 = vunpack.c.l.b16 %v581
    %v615 = vunpack.c.l.b16 %v582
    %v616 = vunpack.c.l.b16 %v583
    %v617 = vunpack.c.l.b16 %v584
    %v618 = vunpack.c.l.b16 %v585
    %v619 = vunpack.c.l.b16 %v586
    %v620 = vunpack.c.l.b16 %v587
    %v621 = vunpack.c.l.b16 %v588
    %v622 = vunpack.c.l.b16 %v589
    %v623 = vunpack.c.l.b16 %v590
    %v624 = vunpack.c.l.b16 %v591
    %v625 = vunpack.c.l.b16 %v592
    %v626 = vunpack.c.l.b16 %v593
    %v627 = vunpack.c.l.b16 %v594
    %v628 = vunpack.c.l.b16 %v595
    %v629 = vunpack.c.l.b16 %v596
    %v630 = vpack.c.b16 %v615, %v614
    %v631 = vpack.c.b16 %v617, %v616
    %v632 = vpack.c.b16 %v619, %v618
    %v633 = vpack.c.b16 %v621, %v620
    %v634 = vpack.c.b16 %v623, %v622
    %v635 = vpack.c.b16 %v625, %v624
    %v636 = vpack.c.b16 %v627, %v626
    %v637 = vpack.c.b16 %v629, %v628
    %646 = vmatprep.subr.bf16.mxu0 0
    %647 = vmatpush1.bf16.msra.mxu0 %v637
    %648 = vmatprep.subr.bf16.mxu0 0
    %649 = vmatpush1.bf16.msra.mxu0 %v636
    %650 = vmatprep.subr.bf16.mxu0 0
    %651 = vmatpush1.bf16.msra.mxu0 %v635
    %652 = vmatprep.subr.bf16.mxu0 0
    %653 = vmatpush1.bf16.msra.mxu0 %v634
    %654 = vmatprep.subr.bf16.mxu0 0
    %655 = vmatpush1.bf16.msra.mxu0 %v633
    %656 = vmatprep.subr.bf16.mxu0 0
    %657 = vmatpush1.bf16.msra.mxu0 %v632
    %658 = vmatprep.subr.bf16.mxu0 0
    %659 = vmatpush1.bf16.msra.mxu0 %v631
    %660 = vmatprep.subr.bf16.mxu0 0
    %661 = vmatpush1.bf16.msra.mxu0 %v630
    %662 = vmatprep.subr.bf16.mxu0 0
    %663 = vmatpush2.bf16.msra.mxu0 0
    %664 = vmatprep.subr.bf16.mxu0 0
    %665 = vmatpush2.bf16.msra.mxu0 0
    %666 = vmatprep.subr.bf16.mxu0 0
    %667 = vmatpush2.bf16.msra.mxu0 0
    %668 = vmatprep.subr.bf16.mxu0 0
    %669 = vmatpush2.bf16.msra.mxu0 0
    %670 = vmatprep.subr.bf16.mxu0 0
    %671 = vmatpush2.bf16.msra.mxu0 0
    %672 = vmatprep.subr.bf16.mxu0 0
    %673 = vmatpush2.bf16.msra.mxu0 0
    %674 = vmatprep.subr.bf16.mxu0 0
    %675 = vmatpush2.bf16.msra.mxu0 0
    %676 = vmatprep.subr.bf16.mxu0 0
    %677 = vmatpush2.bf16.msra.mxu0 0
    %678 = vmatprep.mubr.bf16.mxu0 0
    %679 = vmatmul.mubr.bf16.gmra.mxu0 %v580
    %v680 = vpop.f32.mrf.mxu0
    %v681 = vadd.f32 %v597, %v680
    %v682 = vpop.f32.mrf.mxu0
    %v683 = vpop.f32.mrf.mxu0
    %v684 = vpop.f32.mrf.mxu0
    %685 = vdwg.mxu0
    %vm686 = vcmask 24576
    %687 = vst.msk [vmem:[#allocation6] sm:$0x1] %vm686, %v681
    // Predicated region
    $region30: #{tpu_custom_call.1} parent=1 // pred_check
      _
    $region31: #{tpu_custom_call.1} parent=1 // pred_check_branch
      %689 = sbr.rel (0) target = $region33
    $region32: #{tpu_custom_call.1} parent=1 // pred_region
      %s691 = ssub.s32 16, 16
      %692 = vsyncadd [#allocation5], %s691
      %s694 = sshll.u32 [#allocation6], 4
      %s695 = int_to_ptr.vmem [resolvable:$true] %s694
      %697 = dma.vmem_to_hbm [thread:$0]  %s695, 16, %s6, [#allocation5]
    $region33: #{tpu_custom_call.1} parent=1 // pred_fallthru
      _
    // Predicated region
    $region34: #{tpu_custom_call.1} parent=1 // pred_check
      _
    $region35: #{tpu_custom_call.1} parent=1 // pred_check_branch
      %699 = sbr.rel (0) target = $region37
    $region36: #{tpu_custom_call.1} parent=1 // pred_region
      %700 = dma.done [#allocation5], 16
    $region37: #{tpu_custom_call.1} parent=1 // pred_fallthru
      _
    %701 = vsyncpa [#allocation4], 1
    %702 = vsyncpa [#allocation5], 1

</llo_original>
